<compile_context>
chip_gen: v6e
topology: v6e:2x2x1
jax: 0.10.0
libtpu: 0.0.40
codegen_flags: <defaults>
</compile_context>

<pallas_src>
import jax
import jax.numpy as jnp
from jax.experimental import pallas as pl
from jax.experimental.pallas import tpu as pltpu


def _subnetwork_kernel(x_ref, s0_ref, wtcat_ref, rw_ref, hs_ref):
    # x:     (B, D)      f32   input, shared by every layer
    # s0:    (B, D)      f32   initial prev_state
    # wtcat: (D, L*D)    bf16  lane-concatenated W_l.T stacks
    # rw:    (L, D, D)   bf16  per-layer precomputed R_l @ W_l.T
    # hs:    (L, B, D)   f32   output hidden states (hs[-1] is the new state)
    num_layers = hs_ref.shape[0]
    d = x_ref.shape[1]

    # One wide matmul computes every layer's x-projection up front (off the
    # serial dependency chain).
    xw_all = jnp.dot(
        x_ref[...].astype(jnp.bfloat16),
        wtcat_ref[...],
        preferred_element_type=jnp.float32,
    )  # (B, L*D) f32

    state = s0_ref[...]  # f32
    for l in range(num_layers):  # small, static unroll (L known at trace time)
        pre = xw_all[:, l * d:(l + 1) * d] + jnp.dot(
            state.astype(jnp.bfloat16),
            rw_ref[l],
            preferred_element_type=jnp.float32,
        )
        act = jnp.maximum(pre, 0.0)
        hs_ref[l] = act
        state = act


def _forward_impl(x, prev_state, wt_cat, rw_stack):
    L = rw_stack.shape[0]
    B, D = x.shape
    vmem = pl.BlockSpec(memory_space=pltpu.MemorySpace.VMEM)
    hidden_states = pl.pallas_call(
        _subnetwork_kernel,
        out_shape=jax.ShapeDtypeStruct((L, B, D), jnp.float32),
        in_specs=[vmem, vmem, vmem, vmem],
        out_specs=vmem,
    )(x, prev_state, wt_cat, rw_stack)
    # new_state == hidden_states[-1]; no separate output buffer needed.
    return hidden_states, hidden_states[-1]


subnetwork_forward = jax.jit(_forward_impl)


def init_params(key, input_size, output_size, num_layers, dtype=jnp.bfloat16):
    """torch.randn-style init.

    Returns:
      kernel_params = (wt_cat, rw_stack):
        wt_cat  : (input_size, num_layers*output_size) dtype  -- concat of W_l.T
        rw_stack: (num_layers, output_size, output_size) dtype -- R_l @ W_l.T
      ref_params = (w_q, r_q): torch-layout f32 weights (quantized to `dtype`
        then upcast) used by the plain-JAX reference with the original formula.
    """
    kw, kr = jax.random.split(key, 2)
    w = jax.random.normal(kw, (num_layers, output_size, input_size), jnp.float32)
    r = jax.random.normal(kr, (num_layers, output_size, output_size), jnp.float32)

    # Deployment-dtype quantization happens once at init; both kernel and
    # reference see the same (quantized) model weights.
    w_q = w.astype(dtype).astype(jnp.float32)   # (L, out, in)
    r_q = r.astype(dtype).astype(jnp.float32)   # (L, out, out)

    wt = jnp.transpose(w_q, (0, 2, 1))                               # (L, in, out)
    wt_cat = jnp.transpose(wt, (1, 0, 2)).reshape(
        input_size, num_layers * output_size)                        # (in, L*out)
    rw = jnp.einsum("lij,ljk->lik", r_q, wt)                         # f32 precompute

    return (wt_cat.astype(dtype), rw.astype(dtype)), (w_q, r_q)


def _reference_forward(x, prev_state, w_stack, r_stack):
    """Plain-JAX reference in the exact order of the PyTorch module."""
    hs = []
    state = prev_state
    for l in range(w_stack.shape[0]):
        combined = x + jnp.dot(state, r_stack[l], preferred_element_type=jnp.float32)
        act = jnp.maximum(
            jnp.dot(combined, w_stack[l].T, preferred_element_type=jnp.float32), 0.0
        )
        hs.append(act)
        state = act
    return jnp.stack(hs), state


if __name__ == "__main__":
    key = jax.random.PRNGKey(0)
    k_x, k_s, k_p = jax.random.split(key, 3)

    # HebbianLayer math only type-checks when input_size == output_size.
    # Batch is sublane-dense (multiple of 8), feature dim is lane-dense (128).
    batch = 8
    feat = 128
    num_layers = 3

    x = jax.random.normal(k_x, (batch, feat), jnp.float32)
    prev_state = jax.random.normal(k_s, (batch, feat), jnp.float32)
    (wt_cat, rw_stack), (w_q, r_q) = init_params(k_p, feat, feat, num_layers)

    hidden_states, new_state = subnetwork_forward(x, prev_state, wt_cat, rw_stack)
    hidden_states = jax.block_until_ready(hidden_states)
    new_state = jax.block_until_ready(new_state)

    assert hidden_states.shape == (num_layers, batch, feat)
    assert new_state.shape == (batch, feat)
    assert bool(jnp.all(jnp.isfinite(hidden_states)))
    assert bool(jnp.all(jnp.isfinite(new_state)))

    # Correctness vs. the original-formula reference run with the same
    # (quantized) weights in f32. Tolerance covers the algebraic refactor,
    # bf16 activation operands, and MXU-vs-XLA rounding differences.
    hs_ref, state_ref = _reference_forward(x, prev_state, w_q, r_q)
    scale = jnp.max(jnp.abs(hs_ref)) + 1e-6
    err_hs = jnp.max(jnp.abs(hidden_states - hs_ref)) / scale
    err_st = jnp.max(jnp.abs(new_state - state_ref)) / scale
    assert float(err_hs) < 5e-2, f"hidden_states mismatch: {float(err_hs)}"
    assert float(err_st) < 5e-2, f"new_state mismatch: {float(err_st)}"

    print("KERNEL_OK")
</pallas_src>

<mosaic_0001>
module attributes {stable_mosaic.version = 11 : i64} {
  func.func @_subnetwork_kernel(%arg0: memref<8x128xf32, #tpu.memory_space<vmem>>, %arg1: memref<8x128xf32, #tpu.memory_space<vmem>>, %arg2: memref<128x384xbf16, #tpu.memory_space<vmem>>, %arg3: memref<3x128x128xbf16, #tpu.memory_space<vmem>>, %arg4: memref<3x8x128xf32, #tpu.memory_space<vmem>>) attributes {dimension_semantics = [], scalar_prefetch = 0 : i64, scratch_operands = 0 : i64, tpu.core_type = #tpu.core_type<tc>} {
    %c0 = arith.constant 0 : index
    %c0_0 = arith.constant 0 : index
    %0 = vector.load %arg0[%c0, %c0_0] : memref<8x128xf32, #tpu.memory_space<vmem>>, vector<8x128xf32>
    %1 = arith.truncf %0 : vector<8x128xf32> to vector<8x128xbf16>
    %c0_1 = arith.constant 0 : index
    %c0_2 = arith.constant 0 : index
    %2 = vector.load %arg2[%c0_1, %c0_2] : memref<128x384xbf16, #tpu.memory_space<vmem>>, vector<128x384xbf16>
    %cst = arith.constant dense<0.000000e+00> : vector<8x384xf32>
    %3 = tpu.matmul %1, %2, %cst {dimension_numbers = #tpu.dot_dimension_numbers<[1], [0], [0], [1], [0, 0, 1, 1], [], []>} : vector<8x128xbf16>, vector<128x384xbf16>, vector<8x384xf32> -> vector<8x384xf32>
    %c0_3 = arith.constant 0 : index
    %c0_4 = arith.constant 0 : index
    %4 = vector.load %arg1[%c0_3, %c0_4] : memref<8x128xf32, #tpu.memory_space<vmem>>, vector<8x128xf32>
    %5 = vector.extract_strided_slice %3 {offsets = [0, 0], sizes = [8, 128], strides = [1, 1]} : vector<8x384xf32> to vector<8x128xf32>
    %6 = arith.truncf %4 : vector<8x128xf32> to vector<8x128xbf16>
    %c0_5 = arith.constant 0 : index
    %c0_6 = arith.constant 0 : index
    %c0_7 = arith.constant 0 : index
    %7 = vector.load %arg3[%c0_5, %c0_6, %c0_7] : memref<3x128x128xbf16, #tpu.memory_space<vmem>>, vector<1x128x128xbf16>
    %8 = vector.shape_cast %7 : vector<1x128x128xbf16> to vector<128x128xbf16>
    %cst_8 = arith.constant dense<0.000000e+00> : vector<8x128xf32>
    %9 = tpu.matmul %6, %8, %cst_8 {dimension_numbers = #tpu.dot_dimension_numbers<[1], [0], [0], [1], [0, 0, 1, 1], [], []>} : vector<8x128xbf16>, vector<128x128xbf16>, vector<8x128xf32> -> vector<8x128xf32>
    %10 = arith.addf %5, %9 : vector<8x128xf32>
    %cst_9 = arith.constant 0.000000e+00 : f32
    %11 = vector.broadcast %cst_9 : f32 to vector<8x128xf32>
    %12 = arith.maximumf %10, %11 : vector<8x128xf32>
    %c0_10 = arith.constant 0 : index
    %c0_11 = arith.constant 0 : index
    %c0_12 = arith.constant 0 : index
    %13 = vector.load %arg4[%c0_10, %c0_11, %c0_12] : memref<3x8x128xf32, #tpu.memory_space<vmem>>, vector<1x8x128xf32>
    %14 = vector.shape_cast %13 : vector<1x8x128xf32> to vector<8x128xf32>
    %15 = vector.shape_cast %12 : vector<8x128xf32> to vector<1x8x128xf32>
    tpu.vector_store %arg4[%c0_10, %c0_11, %c0_12], %15 {strides = array<i32>} : memref<3x8x128xf32, #tpu.memory_space<vmem>>, vector<1x8x128xf32>,
    %16 = vector.extract_strided_slice %3 {offsets = [0, 128], sizes = [8, 128], strides = [1, 1]} : vector<8x384xf32> to vector<8x128xf32>
    %17 = arith.truncf %12 : vector<8x128xf32> to vector<8x128xbf16>
    %c1 = arith.constant 1 : index
    %c0_13 = arith.constant 0 : index
    %c0_14 = arith.constant 0 : index
    %18 = vector.load %arg3[%c1, %c0_13, %c0_14] : memref<3x128x128xbf16, #tpu.memory_space<vmem>>, vector<1x128x128xbf16>
    %19 = vector.shape_cast %18 : vector<1x128x128xbf16> to vector<128x128xbf16>
    %cst_15 = arith.constant dense<0.000000e+00> : vector<8x128xf32>
    %20 = tpu.matmul %17, %19, %cst_15 {dimension_numbers = #tpu.dot_dimension_numbers<[1], [0], [0], [1], [0, 0, 1, 1], [], []>} : vector<8x128xbf16>, vector<128x128xbf16>, vector<8x128xf32> -> vector<8x128xf32>
    %21 = arith.addf %16, %20 : vector<8x128xf32>
    %cst_16 = arith.constant 0.000000e+00 : f32
    %22 = vector.broadcast %cst_16 : f32 to vector<8x128xf32>
    %23 = arith.maximumf %21, %22 : vector<8x128xf32>
    %c1_17 = arith.constant 1 : index
    %c0_18 = arith.constant 0 : index
    %c0_19 = arith.constant 0 : index
    %24 = vector.load %arg4[%c1_17, %c0_18, %c0_19] : memref<3x8x128xf32, #tpu.memory_space<vmem>>, vector<1x8x128xf32>
    %25 = vector.shape_cast %24 : vector<1x8x128xf32> to vector<8x128xf32>
    %26 = vector.shape_cast %23 : vector<8x128xf32> to vector<1x8x128xf32>
    tpu.vector_store %arg4[%c1_17, %c0_18, %c0_19], %26 {strides = array<i32>} : memref<3x8x128xf32, #tpu.memory_space<vmem>>, vector<1x8x128xf32>,
    %27 = vector.extract_strided_slice %3 {offsets = [0, 256], sizes = [8, 128], strides = [1, 1]} : vector<8x384xf32> to vector<8x128xf32>
    %28 = arith.truncf %23 : vector<8x128xf32> to vector<8x128xbf16>
    %c2 = arith.constant 2 : index
    %c0_20 = arith.constant 0 : index
    %c0_21 = arith.constant 0 : index
    %29 = vector.load %arg3[%c2, %c0_20, %c0_21] : memref<3x128x128xbf16, #tpu.memory_space<vmem>>, vector<1x128x128xbf16>
    %30 = vector.shape_cast %29 : vector<1x128x128xbf16> to vector<128x128xbf16>
    %cst_22 = arith.constant dense<0.000000e+00> : vector<8x128xf32>
    %31 = tpu.matmul %28, %30, %cst_22 {dimension_numbers = #tpu.dot_dimension_numbers<[1], [0], [0], [1], [0, 0, 1, 1], [], []>} : vector<8x128xbf16>, vector<128x128xbf16>, vector<8x128xf32> -> vector<8x128xf32>
    %32 = arith.addf %27, %31 : vector<8x128xf32>
    %cst_23 = arith.constant 0.000000e+00 : f32
    %33 = vector.broadcast %cst_23 : f32 to vector<8x128xf32>
    %34 = arith.maximumf %32, %33 : vector<8x128xf32>
    %c2_24 = arith.constant 2 : index
    %c0_25 = arith.constant 0 : index
    %c0_26 = arith.constant 0 : index
    %35 = vector.load %arg4[%c2_24, %c0_25, %c0_26] : memref<3x8x128xf32, #tpu.memory_space<vmem>>, vector<1x8x128xf32>
    %36 = vector.shape_cast %35 : vector<1x8x128xf32> to vector<8x128xf32>
    %37 = vector.shape_cast %34 : vector<8x128xf32> to vector<1x8x128xf32>
    tpu.vector_store %arg4[%c2_24, %c0_25, %c0_26], %37 {strides = array<i32>} : memref<3x8x128xf32, #tpu.memory_space<vmem>>, vector<1x8x128xf32>,
    return
  }
}

</mosaic_0001>

<llo_original>
// kernel: _forward_impl.1
$region0: #{_forward_impl.1}
  #allocation0 [shape = 'u32[]', space=smem, size = 0x4, offset = 0x4, fixed_abs, tag = 'smem constant byte address 0x4 - core index']
  #allocation1 [shape = 'u32[144,128]{1,0:T(1,128)}', space=vmem, size = 0x12000, scoped, tag = 'internal scratch']
  %s0 = inlined_call_operand.hbm [shape: f32[8,128], index: 0, kind: input, shape index: {}]
  %s1 = inlined_call_operand.hbm [shape: f32[8,128], index: 1, kind: input, shape index: {}]
  %s2 = inlined_call_operand.hbm [shape: bf16[128,384], index: 2, kind: input, shape index: {}]
  %s3 = inlined_call_operand.hbm [shape: bf16[3,128,128], index: 3, kind: input, shape index: {}]
  %s4 = inlined_call_operand.vmem [shape: f32[3,8,128], index: 4, kind: output, shape index: {}]
  %s5 = sld [smem:[#allocation0]]
  $region42: #{_forward_impl.1} parent=0
    _
  %s7 = ssub.s32 1, %s5
  %s8 = scalar_select 0, %s7, %s5
  $region1: #{_forward_impl.1} parent=0
    #allocation2 [shape = 'u8[4096]{0}', space=vmem, size = 0x1000, scoped, tag = 'input window, operand 0, single buffered']
    #allocation3 [shape = 's32[1]{0}', space=sflag, size = 0x4, scoped, tag = 'scoped memory for _forward_impl.1']
    #allocation4 [shape = 'u8[4096]{0}', space=vmem, size = 0x1000, scoped, tag = 'input window, operand 1, single buffered']
    #allocation5 [shape = 's32[1]{0}', space=sflag, size = 0x4, scoped, tag = 'scoped memory for _forward_impl.1']
    #allocation6 [shape = 'u8[98304]{0}', space=vmem, size = 0x18000, scoped, tag = 'input window, operand 2, single buffered']
    #allocation7 [shape = 'u8[98304]{0}', space=vmem, size = 0x18000, scoped, tag = 'input window, operand 3, single buffered']
    #allocation8 [shape = 's32[1]{0}', space=sflag, size = 0x4, scoped, tag = 'scoped memory for _forward_impl.1']
    %9 = vsyncpa [#allocation3], 0
    %10 = vsyncpa [#allocation5], 0
    %11 = vsyncpa [#allocation8], 0
    // Predicated region
    $region2: #{_forward_impl.1} parent=1 // pred_check
      _
    $region3: #{_forward_impl.1} parent=1 // pred_check_branch
      %13 = sbr.rel (0) target = $region5
    $region4: #{_forward_impl.1} parent=1 // pred_region
      %s15 = ssub.s32 128, 128
      %16 = vsyncadd [#allocation3], %s15
      %s18 = sshll.u32 [#allocation2], 4
      %s19 = int_to_ptr.vmem [resolvable:$true] %s18
      %21 = dma.hbm_to_vmem [thread:$0]  %s0, 128, %s19, [#allocation3]
    $region5: #{_forward_impl.1} parent=1 // pred_fallthru
      _
    // Predicated region
    $region6: #{_forward_impl.1} parent=1 // pred_check
      _
    $region7: #{_forward_impl.1} parent=1 // pred_check_branch
      %23 = sbr.rel (0) target = $region9
    $region8: #{_forward_impl.1} parent=1 // pred_region
      %s25 = ssub.s32 128, 128
      %26 = vsyncadd [#allocation5], %s25
      %s28 = sshll.u32 [#allocation4], 4
      %s29 = int_to_ptr.vmem [resolvable:$true] %s28
      %31 = dma.hbm_to_vmem [thread:$0]  %s1, 128, %s29, [#allocation5]
    $region9: #{_forward_impl.1} parent=1 // pred_fallthru
      _
    // Predicated region
    $region10: #{_forward_impl.1} parent=1 // pred_check
      _
    $region11: #{_forward_impl.1} parent=1 // pred_check_branch
      %33 = sbr.rel (0) target = $region13
    $region12: #{_forward_impl.1} parent=1 // pred_region
      %s35 = ssub.s32 3072, 3072
      %36 = vsyncadd [#allocation5], %s35
      %s37 = sshll.u32 [#allocation6], 4
      %s38 = int_to_ptr.vmem [resolvable:$true] %s37
      %43 = dma.hbm_to_vmem [thread:$0]  %s2, 3072, %s38, [#allocation5], 192, 192, 12
    $region13: #{_forward_impl.1} parent=1 // pred_fallthru
      _
    // Predicated region
    $region14: #{_forward_impl.1} parent=1 // pred_check
      _
    $region15: #{_forward_impl.1} parent=1 // pred_check_branch
      %45 = sbr.rel (0) target = $region17
    $region16: #{_forward_impl.1} parent=1 // pred_region
      %s47 = ssub.s32 3072, 3072
      %48 = vsyncadd [#allocation8], %s47
      %s49 = sshll.u32 [#allocation7], 4
      %s50 = int_to_ptr.vmem [resolvable:$true] %s49
      %55 = dma.hbm_to_vmem [thread:$0]  %s3, 3072, %s50, [#allocation8], 64, 64, 4
    $region17: #{_forward_impl.1} parent=1 // pred_fallthru
      _
    // Predicated region
    $region18: #{_forward_impl.1} parent=1 // pred_check
      _
    $region19: #{_forward_impl.1} parent=1 // pred_check_branch
      %57 = sbr.rel (0) target = $region21
    $region20: #{_forward_impl.1} parent=1 // pred_region
      %58 = dma.done [#allocation3], 128
    $region21: #{_forward_impl.1} parent=1 // pred_fallthru
      _
    // Predicated region
    $region22: #{_forward_impl.1} parent=1 // pred_check
      _
    $region23: #{_forward_impl.1} parent=1 // pred_check_branch
      %60 = sbr.rel (0) target = $region25
    $region24: #{_forward_impl.1} parent=1 // pred_region
      %61 = dma.done [#allocation5], 128
    $region25: #{_forward_impl.1} parent=1 // pred_fallthru
      _
    // Predicated region
    $region26: #{_forward_impl.1} parent=1 // pred_check
      _
    $region27: #{_forward_impl.1} parent=1 // pred_check_branch
      %63 = sbr.rel (0) target = $region29
    $region28: #{_forward_impl.1} parent=1 // pred_region
      %64 = dma.done [#allocation5], 3072
    $region29: #{_forward_impl.1} parent=1 // pred_fallthru
      _
    // Predicated region
    $region30: #{_forward_impl.1} parent=1 // pred_check
      _
    $region31: #{_forward_impl.1} parent=1 // pred_check_branch
      %66 = sbr.rel (0) target = $region33
    $region32: #{_forward_impl.1} parent=1 // pred_region
      %67 = dma.done [#allocation8], 3072
    $region33: #{_forward_impl.1} parent=1 // pred_fallthru
      _
    %v69 = vld [vmem:[#allocation2] sm:$0xff]
    %v70 = vpack.c.bf16 %v69, %v69
    %v71 = vld [vmem:[#allocation6] sm:$0xff]
    %v72 = vld [vmem:[#allocation6 + $0x8] sm:$0xf]
    %v73 = vld [vmem:[#allocation6 + $0xc] sm:$0xff]
    %v74 = vld [vmem:[#allocation6 + $0x14] sm:$0xf]
    %v75 = vld [vmem:[#allocation6 + $0x18] sm:$0xff]
    %v76 = vld [vmem:[#allocation6 + $0x20] sm:$0xf]
    %v77 = vld [vmem:[#allocation6 + $0x24] sm:$0xff]
    %v78 = vld [vmem:[#allocation6 + $0x2c] sm:$0xf]
    %v79 = vld [vmem:[#allocation6 + $0x30] sm:$0xff]
    %v80 = vld [vmem:[#allocation6 + $0x38] sm:$0xf]
    %v81 = vld [vmem:[#allocation6 + $0x3c] sm:$0xff]
    %v82 = vld [vmem:[#allocation6 + $0x44] sm:$0xf]
    %v83 = vld [vmem:[#allocation6 + $0x48] sm:$0xff]
    %v84 = vld [vmem:[#allocation6 + $0x50] sm:$0xf]
    %v85 = vld [vmem:[#allocation6 + $0x54] sm:$0xff]
    %v86 = vld [vmem:[#allocation6 + $0x5c] sm:$0xf]
    %v87 = vld [vmem:[#allocation6 + $0x60] sm:$0xff]
    %v88 = vld [vmem:[#allocation6 + $0x68] sm:$0xf]
    %v89 = vld [vmem:[#allocation6 + $0x6c] sm:$0xff]
    %v90 = vld [vmem:[#allocation6 + $0x74] sm:$0xf]
    %v91 = vld [vmem:[#allocation6 + $0x78] sm:$0xff]
    %v92 = vld [vmem:[#allocation6 + $0x80] sm:$0xf]
    %v93 = vld [vmem:[#allocation6 + $0x84] sm:$0xff]
    %v94 = vld [vmem:[#allocation6 + $0x8c] sm:$0xf]
    %v95 = vld [vmem:[#allocation6 + $0x90] sm:$0xff]
    %v96 = vld [vmem:[#allocation6 + $0x98] sm:$0xf]
    %v97 = vld [vmem:[#allocation6 + $0x9c] sm:$0xff]
    %v98 = vld [vmem:[#allocation6 + $0xa4] sm:$0xf]
    %v99 = vld [vmem:[#allocation6 + $0xa8] sm:$0xff]
    %v100 = vld [vmem:[#allocation6 + $0xb0] sm:$0xf]
    %v101 = vld [vmem:[#allocation6 + $0xb4] sm:$0xff]
    %v102 = vld [vmem:[#allocation6 + $0xbc] sm:$0xf]
    %v135 = vunpack.c.l.b16 %v71
    %v136 = vunpack.c.h.b16 %v71
    %v137 = vunpack.c.l.b16 %v72
    %v138 = vunpack.c.l.b16 %v73
    %v139 = vunpack.c.h.b16 %v73
    %v140 = vunpack.c.l.b16 %v74
    %v141 = vunpack.c.l.b16 %v75
    %v142 = vunpack.c.h.b16 %v75
    %v143 = vunpack.c.l.b16 %v76
    %v144 = vunpack.c.l.b16 %v77
    %v145 = vunpack.c.h.b16 %v77
    %v146 = vunpack.c.l.b16 %v78
    %v147 = vunpack.c.l.b16 %v79
    %v148 = vunpack.c.h.b16 %v79
    %v149 = vunpack.c.l.b16 %v80
    %v150 = vunpack.c.l.b16 %v81
    %v151 = vunpack.c.h.b16 %v81
    %v152 = vunpack.c.l.b16 %v82
    %v153 = vunpack.c.l.b16 %v83
    %v154 = vunpack.c.h.b16 %v83
    %v155 = vunpack.c.l.b16 %v84
    %v156 = vunpack.c.l.b16 %v85
    %v157 = vunpack.c.h.b16 %v85
    %v158 = vunpack.c.l.b16 %v86
    %v159 = vunpack.c.l.b16 %v87
    %v160 = vunpack.c.h.b16 %v87
    %v161 = vunpack.c.l.b16 %v88
    %v162 = vunpack.c.l.b16 %v89
    %v163 = vunpack.c.h.b16 %v89
    %v164 = vunpack.c.l.b16 %v90
    %v165 = vunpack.c.l.b16 %v91
    %v166 = vunpack.c.h.b16 %v91
    %v167 = vunpack.c.l.b16 %v92
    %v168 = vunpack.c.l.b16 %v93
    %v169 = vunpack.c.h.b16 %v93
    %v170 = vunpack.c.l.b16 %v94
    %v171 = vunpack.c.l.b16 %v95
    %v172 = vunpack.c.h.b16 %v95
    %v173 = vunpack.c.l.b16 %v96
    %v174 = vunpack.c.l.b16 %v97
    %v175 = vunpack.c.h.b16 %v97
    %v176 = vunpack.c.l.b16 %v98
    %v177 = vunpack.c.l.b16 %v99
    %v178 = vunpack.c.h.b16 %v99
    %v179 = vunpack.c.l.b16 %v100
    %v180 = vunpack.c.l.b16 %v101
    %v181 = vunpack.c.h.b16 %v101
    %v182 = vunpack.c.l.b16 %v102
    %v183 = vpack.c.b16 %v138, %v135
    %v184 = vpack.c.b16 %v139, %v136
    %v185 = vpack.c.b16 %v140, %v137
    %v186 = vpack.c.b16 %v144, %v141
    %v187 = vpack.c.b16 %v145, %v142
    %v188 = vpack.c.b16 %v146, %v143
    %v189 = vpack.c.b16 %v150, %v147
    %v190 = vpack.c.b16 %v151, %v148
    %v191 = vpack.c.b16 %v152, %v149
    %v192 = vpack.c.b16 %v156, %v153
    %v193 = vpack.c.b16 %v157, %v154
    %v194 = vpack.c.b16 %v158, %v155
    %v195 = vpack.c.b16 %v162, %v159
    %v196 = vpack.c.b16 %v163, %v160
    %v197 = vpack.c.b16 %v164, %v161
    %v198 = vpack.c.b16 %v168, %v165
    %v199 = vpack.c.b16 %v169, %v166
    %v200 = vpack.c.b16 %v170, %v167
    %v201 = vpack.c.b16 %v174, %v171
    %v202 = vpack.c.b16 %v175, %v172
    %v203 = vpack.c.b16 %v176, %v173
    %v204 = vpack.c.b16 %v180, %v177
    %v205 = vpack.c.b16 %v181, %v178
    %v206 = vpack.c.b16 %v182, %v179
    %231 = vmatprep.subr.bf16.mxu0 %v205
    %232 = vmatpush1.bf16.msra.mxu0 %v204
    %233 = vmatprep.subr.bf16.mxu0 %v202
    %234 = vmatpush1.bf16.msra.mxu0 %v201
    %235 = vmatprep.subr.bf16.mxu0 %v199
    %236 = vmatpush1.bf16.msra.mxu0 %v198
    %237 = vmatprep.subr.bf16.mxu0 %v196
    %238 = vmatpush1.bf16.msra.mxu0 %v195
    %239 = vmatprep.subr.bf16.mxu0 %v193
    %240 = vmatpush1.bf16.msra.mxu0 %v192
    %241 = vmatprep.subr.bf16.mxu0 %v190
    %242 = vmatpush1.bf16.msra.mxu0 %v189
    %243 = vmatprep.subr.bf16.mxu0 %v187
    %244 = vmatpush1.bf16.msra.mxu0 %v186
    %245 = vmatprep.subr.bf16.mxu0 %v184
    %246 = vmatpush1.bf16.msra.mxu0 %v183
    %247 = vmatprep.subr.bf16.mxu0 0
    %248 = vmatpush2.bf16.msra.mxu0 0
    %249 = vmatprep.subr.bf16.mxu0 0
    %250 = vmatpush2.bf16.msra.mxu0 0
    %251 = vmatprep.subr.bf16.mxu0 0
    %252 = vmatpush2.bf16.msra.mxu0 0
    %253 = vmatprep.subr.bf16.mxu0 0
    %254 = vmatpush2.bf16.msra.mxu0 0
    %255 = vmatprep.subr.bf16.mxu0 0
    %256 = vmatpush2.bf16.msra.mxu0 0
    %257 = vmatprep.subr.bf16.mxu0 0
    %258 = vmatpush2.bf16.msra.mxu0 0
    %259 = vmatprep.subr.bf16.mxu0 0
    %260 = vmatpush2.bf16.msra.mxu0 0
    %261 = vmatprep.subr.bf16.mxu0 0
    %262 = vmatpush2.bf16.msra.mxu0 0
    %263 = vmatprep.mubr.bf16.mxu0 0
    %264 = vmatmul.mubr.bf16.gmra.mxu0 %v70
    %v265 = vpop.f32.mrf.mxu0
    %v266 = vadd.f32 0.0, %v265
    %v267 = vpop.f32.mrf.mxu0
    %v268 = vadd.f32 0.0, %v267
    %v269 = vpop.f32.mrf.mxu0
    %v270 = vpop.f32.mrf.mxu0
    %271 = vdwg.mxu0
    %272 = vmatprep.subr.bf16.mxu0 0
    %273 = vmatpush1.bf16.msra.mxu0 %v206
    %274 = vmatprep.subr.bf16.mxu0 0
    %275 = vmatpush1.bf16.msra.mxu0 %v203
    %276 = vmatprep.subr.bf16.mxu0 0
    %277 = vmatpush1.bf16.msra.mxu0 %v200
    %278 = vmatprep.subr.bf16.mxu0 0
    %279 = vmatpush1.bf16.msra.mxu0 %v197
    %280 = vmatprep.subr.bf16.mxu0 0
    %281 = vmatpush1.bf16.msra.mxu0 %v194
    %282 = vmatprep.subr.bf16.mxu0 0
    %283 = vmatpush1.bf16.msra.mxu0 %v191
    %284 = vmatprep.subr.bf16.mxu0 0
    %285 = vmatpush1.bf16.msra.mxu0 %v188
    %286 = vmatprep.subr.bf16.mxu0 0
    %287 = vmatpush1.bf16.msra.mxu0 %v185
    %288 = vmatprep.subr.bf16.mxu0 0
    %289 = vmatpush2.bf16.msra.mxu0 0
    %290 = vmatprep.subr.bf16.mxu0 0
    %291 = vmatpush2.bf16.msra.mxu0 0
    %292 = vmatprep.subr.bf16.mxu0 0
    %293 = vmatpush2.bf16.msra.mxu0 0
    %294 = vmatprep.subr.bf16.mxu0 0
    %295 = vmatpush2.bf16.msra.mxu0 0
    %296 = vmatprep.subr.bf16.mxu0 0
    %297 = vmatpush2.bf16.msra.mxu0 0
    %298 = vmatprep.subr.bf16.mxu0 0
    %299 = vmatpush2.bf16.msra.mxu0 0
    %300 = vmatprep.subr.bf16.mxu0 0
    %301 = vmatpush2.bf16.msra.mxu0 0
    %302 = vmatprep.subr.bf16.mxu0 0
    %303 = vmatpush2.bf16.msra.mxu0 0
    %304 = vmatprep.mubr.bf16.mxu0 0
    %305 = vmatmul.mubr.bf16.gmra.mxu0 %v70
    %v306 = vpop.f32.mrf.mxu0
    %v307 = vadd.f32 0.0, %v306
    %v308 = vpop.f32.mrf.mxu0
    %v309 = vpop.f32.mrf.mxu0
    %v310 = vpop.f32.mrf.mxu0
    %311 = vdwg.mxu0
    %v312 = vld [vmem:[#allocation4] sm:$0xff]
    %v313 = vpack.c.bf16 %v312, %v312
    %v314 = vld [vmem:[#allocation7] sm:$0xf]
    %v315 = vld [vmem:[#allocation7 + $0x4] sm:$0xf]
    %v316 = vld [vmem:[#allocation7 + $0x8] sm:$0xf]
    %v317 = vld [vmem:[#allocation7 + $0xc] sm:$0xf]
    %v318 = vld [vmem:[#allocation7 + $0x10] sm:$0xf]
    %v319 = vld [vmem:[#allocation7 + $0x14] sm:$0xf]
    %v320 = vld [vmem:[#allocation7 + $0x18] sm:$0xf]
    %v321 = vld [vmem:[#allocation7 + $0x1c] sm:$0xf]
    %v322 = vld [vmem:[#allocation7 + $0x20] sm:$0xf]
    %v323 = vld [vmem:[#allocation7 + $0x24] sm:$0xf]
    %v324 = vld [vmem:[#allocation7 + $0x28] sm:$0xf]
    %v325 = vld [vmem:[#allocation7 + $0x2c] sm:$0xf]
    %v326 = vld [vmem:[#allocation7 + $0x30] sm:$0xf]
    %v327 = vld [vmem:[#allocation7 + $0x34] sm:$0xf]
    %v328 = vld [vmem:[#allocation7 + $0x38] sm:$0xf]
    %v329 = vld [vmem:[#allocation7 + $0x3c] sm:$0xf]
    %v346 = vunpack.c.l.b16 %v314
    %v347 = vunpack.c.l.b16 %v315
    %v348 = vunpack.c.l.b16 %v316
    %v349 = vunpack.c.l.b16 %v317
    %v350 = vunpack.c.l.b16 %v318
    %v351 = vunpack.c.l.b16 %v319
    %v352 = vunpack.c.l.b16 %v320
    %v353 = vunpack.c.l.b16 %v321
    %v354 = vunpack.c.l.b16 %v322
    %v355 = vunpack.c.l.b16 %v323
    %v356 = vunpack.c.l.b16 %v324
    %v357 = vunpack.c.l.b16 %v325
    %v358 = vunpack.c.l.b16 %v326
    %v359 = vunpack.c.l.b16 %v327
    %v360 = vunpack.c.l.b16 %v328
    %v361 = vunpack.c.l.b16 %v329
    %v362 = vpack.c.b16 %v347, %v346
    %v363 = vpack.c.b16 %v349, %v348
    %v364 = vpack.c.b16 %v351, %v350
    %v365 = vpack.c.b16 %v353, %v352
    %v366 = vpack.c.b16 %v355, %v354
    %v367 = vpack.c.b16 %v357, %v356
    %v368 = vpack.c.b16 %v359, %v358
    %v369 = vpack.c.b16 %v361, %v360
    %378 = vmatprep.subr.bf16.mxu0 0
    %379 = vmatpush1.bf16.msra.mxu0 %v369
    %380 = vmatprep.subr.bf16.mxu0 0
    %381 = vmatpush1.bf16.msra.mxu0 %v368
    %382 = vmatprep.subr.bf16.mxu0 0
    %383 = vmatpush1.bf16.msra.mxu0 %v367
    %384 = vmatprep.subr.bf16.mxu0 0
    %385 = vmatpush1.bf16.msra.mxu0 %v366
    %386 = vmatprep.subr.bf16.mxu0 0
    %387 = vmatpush1.bf16.msra.mxu0 %v365
    %388 = vmatprep.subr.bf16.mxu0 0
    %389 = vmatpush1.bf16.msra.mxu0 %v364
    %390 = vmatprep.subr.bf16.mxu0 0
    %391 = vmatpush1.bf16.msra.mxu0 %v363
    %392 = vmatprep.subr.bf16.mxu0 0
    %393 = vmatpush1.bf16.msra.mxu0 %v362
    %394 = vmatprep.subr.bf16.mxu0 0
    %395 = vmatpush2.bf16.msra.mxu0 0
    %396 = vmatprep.subr.bf16.mxu0 0
    %397 = vmatpush2.bf16.msra.mxu0 0
    %398 = vmatprep.subr.bf16.mxu0 0
    %399 = vmatpush2.bf16.msra.mxu0 0
    %400 = vmatprep.subr.bf16.mxu0 0
    %401 = vmatpush2.bf16.msra.mxu0 0
    %402 = vmatprep.subr.bf16.mxu0 0
    %403 = vmatpush2.bf16.msra.mxu0 0
    %404 = vmatprep.subr.bf16.mxu0 0
    %405 = vmatpush2.bf16.msra.mxu0 0
    %406 = vmatprep.subr.bf16.mxu0 0
    %407 = vmatpush2.bf16.msra.mxu0 0
    %408 = vmatprep.subr.bf16.mxu0 0
    %409 = vmatpush2.bf16.msra.mxu0 0
    %410 = vmatprep.mubr.bf16.mxu0 0
    %411 = vmatmul.mubr.bf16.gmra.mxu0 %v313
    %v412 = vpop.f32.mrf.mxu0
    %v413 = vadd.f32 0.0, %v412
    %v414 = vpop.f32.mrf.mxu0
    %v415 = vpop.f32.mrf.mxu0
    %v416 = vpop.f32.mrf.mxu0
    %417 = vdwg.mxu0
    %v418 = vadd.f32 %v266, %v413
    %v419 = vmax.f32 %v418, 0.0
    %420 = vst [vmem:[%s4] sm:$0xff] %v419
    %v421 = vpack.c.bf16 %v419, %v419
    %s422 = scalar_lea.vmem [#allocation7], 64
    %v423 = vld [vmem:[%s422] sm:$0xf]
    %v424 = vld [vmem:[%s422 + $0x4] sm:$0xf]
    %v425 = vld [vmem:[%s422 + $0x8] sm:$0xf]
    %v426 = vld [vmem:[%s422 + $0xc] sm:$0xf]
    %v427 = vld [vmem:[%s422 + $0x10] sm:$0xf]
    %v428 = vld [vmem:[%s422 + $0x14] sm:$0xf]
    %v429 = vld [vmem:[%s422 + $0x18] sm:$0xf]
    %v430 = vld [vmem:[%s422 + $0x1c] sm:$0xf]
    %v431 = vld [vmem:[%s422 + $0x20] sm:$0xf]
    %v432 = vld [vmem:[%s422 + $0x24] sm:$0xf]
    %v433 = vld [vmem:[%s422 + $0x28] sm:$0xf]
    %v434 = vld [vmem:[%s422 + $0x2c] sm:$0xf]
    %v435 = vld [vmem:[%s422 + $0x30] sm:$0xf]
    %v436 = vld [vmem:[%s422 + $0x34] sm:$0xf]
    %v437 = vld [vmem:[%s422 + $0x38] sm:$0xf]
    %v438 = vld [vmem:[%s422 + $0x3c] sm:$0xf]
    %v455 = vunpack.c.l.b16 %v423
    %v456 = vunpack.c.l.b16 %v424
    %v457 = vunpack.c.l.b16 %v425
    %v458 = vunpack.c.l.b16 %v426
    %v459 = vunpack.c.l.b16 %v427
    %v460 = vunpack.c.l.b16 %v428
    %v461 = vunpack.c.l.b16 %v429
    %v462 = vunpack.c.l.b16 %v430
    %v463 = vunpack.c.l.b16 %v431
    %v464 = vunpack.c.l.b16 %v432
    %v465 = vunpack.c.l.b16 %v433
    %v466 = vunpack.c.l.b16 %v434
    %v467 = vunpack.c.l.b16 %v435
    %v468 = vunpack.c.l.b16 %v436
    %v469 = vunpack.c.l.b16 %v437
    %v470 = vunpack.c.l.b16 %v438
    %v471 = vpack.c.b16 %v456, %v455
    %v472 = vpack.c.b16 %v458, %v457
    %v473 = vpack.c.b16 %v460, %v459
    %v474 = vpack.c.b16 %v462, %v461
    %v475 = vpack.c.b16 %v464, %v463
    %v476 = vpack.c.b16 %v466, %v465
    %v477 = vpack.c.b16 %v468, %v467
    %v478 = vpack.c.b16 %v470, %v469
    %487 = vmatprep.subr.bf16.mxu0 0
    %488 = vmatpush1.bf16.msra.mxu0 %v478
    %489 = vmatprep.subr.bf16.mxu0 0
    %490 = vmatpush1.bf16.msra.mxu0 %v477
    %491 = vmatprep.subr.bf16.mxu0 0
    %492 = vmatpush1.bf16.msra.mxu0 %v476
    %493 = vmatprep.subr.bf16.mxu0 0
    %494 = vmatpush1.bf16.msra.mxu0 %v475
    %495 = vmatprep.subr.bf16.mxu0 0
    %496 = vmatpush1.bf16.msra.mxu0 %v474
    %497 = vmatprep.subr.bf16.mxu0 0
    %498 = vmatpush1.bf16.msra.mxu0 %v473
    %499 = vmatprep.subr.bf16.mxu0 0
    %500 = vmatpush1.bf16.msra.mxu0 %v472
    %501 = vmatprep.subr.bf16.mxu0 0
    %502 = vmatpush1.bf16.msra.mxu0 %v471
    %503 = vmatprep.subr.bf16.mxu0 0
    %504 = vmatpush2.bf16.msra.mxu0 0
    %505 = vmatprep.subr.bf16.mxu0 0
    %506 = vmatpush2.bf16.msra.mxu0 0
    %507 = vmatprep.subr.bf16.mxu0 0
    %508 = vmatpush2.bf16.msra.mxu0 0
    %509 = vmatprep.subr.bf16.mxu0 0
    %510 = vmatpush2.bf16.msra.mxu0 0
    %511 = vmatprep.subr.bf16.mxu0 0
    %512 = vmatpush2.bf16.msra.mxu0 0
    %513 = vmatprep.subr.bf16.mxu0 0
    %514 = vmatpush2.bf16.msra.mxu0 0
    %515 = vmatprep.subr.bf16.mxu0 0
    %516 = vmatpush2.bf16.msra.mxu0 0
    %517 = vmatprep.subr.bf16.mxu0 0
    %518 = vmatpush2.bf16.msra.mxu0 0
    %519 = vmatprep.mubr.bf16.mxu0 0
    %520 = vmatmul.mubr.bf16.gmra.mxu0 %v421
    %v521 = vpop.f32.mrf.mxu0
    %v522 = vadd.f32 0.0, %v521
    %v523 = vpop.f32.mrf.mxu0
    %v524 = vpop.f32.mrf.mxu0
    %v525 = vpop.f32.mrf.mxu0
    %526 = vdwg.mxu0
    %v527 = vadd.f32 %v268, %v522
    %v528 = vmax.f32 %v527, 0.0
    %s529 = scalar_lea.vmem %s4, 8
    %530 = vst [vmem:[%s529] sm:$0xff] %v528
    %v531 = vpack.c.bf16 %v528, %v528
    %s532 = scalar_lea.vmem [#allocation7], 128
    %v533 = vld [vmem:[%s532] sm:$0xf]
    %v534 = vld [vmem:[%s532 + $0x4] sm:$0xf]
    %v535 = vld [vmem:[%s532 + $0x8] sm:$0xf]
    %v536 = vld [vmem:[%s532 + $0xc] sm:$0xf]
    %v537 = vld [vmem:[%s532 + $0x10] sm:$0xf]
    %v538 = vld [vmem:[%s532 + $0x14] sm:$0xf]
    %v539 = vld [vmem:[%s532 + $0x18] sm:$0xf]
    %v540 = vld [vmem:[%s532 + $0x1c] sm:$0xf]
    %v541 = vld [vmem:[%s532 + $0x20] sm:$0xf]
    %v542 = vld [vmem:[%s532 + $0x24] sm:$0xf]
    %v543 = vld [vmem:[%s532 + $0x28] sm:$0xf]
    %v544 = vld [vmem:[%s532 + $0x2c] sm:$0xf]
    %v545 = vld [vmem:[%s532 + $0x30] sm:$0xf]
    %v546 = vld [vmem:[%s532 + $0x34] sm:$0xf]
    %v547 = vld [vmem:[%s532 + $0x38] sm:$0xf]
    %v548 = vld [vmem:[%s532 + $0x3c] sm:$0xf]
    %v565 = vunpack.c.l.b16 %v533
    %v566 = vunpack.c.l.b16 %v534
    %v567 = vunpack.c.l.b16 %v535
    %v568 = vunpack.c.l.b16 %v536
    %v569 = vunpack.c.l.b16 %v537
    %v570 = vunpack.c.l.b16 %v538
    %v571 = vunpack.c.l.b16 %v539
    %v572 = vunpack.c.l.b16 %v540
    %v573 = vunpack.c.l.b16 %v541
    %v574 = vunpack.c.l.b16 %v542
    %v575 = vunpack.c.l.b16 %v543
    %v576 = vunpack.c.l.b16 %v544
    %v577 = vunpack.c.l.b16 %v545
    %v578 = vunpack.c.l.b16 %v546
    %v579 = vunpack.c.l.b16 %v547
    %v580 = vunpack.c.l.b16 %v548
    %v581 = vpack.c.b16 %v566, %v565
    %v582 = vpack.c.b16 %v568, %v567
    %v583 = vpack.c.b16 %v570, %v569
    %v584 = vpack.c.b16 %v572, %v571
    %v585 = vpack.c.b16 %v574, %v573
    %v586 = vpack.c.b16 %v576, %v575
    %v587 = vpack.c.b16 %v578, %v577
    %v588 = vpack.c.b16 %v580, %v579
    %597 = vmatprep.subr.bf16.mxu0 0
    %598 = vmatpush1.bf16.msra.mxu0 %v588
    %599 = vmatprep.subr.bf16.mxu0 0
    %600 = vmatpush1.bf16.msra.mxu0 %v587
    %601 = vmatprep.subr.bf16.mxu0 0
    %602 = vmatpush1.bf16.msra.mxu0 %v586
    %603 = vmatprep.subr.bf16.mxu0 0
    %604 = vmatpush1.bf16.msra.mxu0 %v585
    %605 = vmatprep.subr.bf16.mxu0 0
    %606 = vmatpush1.bf16.msra.mxu0 %v584
    %607 = vmatprep.subr.bf16.mxu0 0
    %608 = vmatpush1.bf16.msra.mxu0 %v583
    %609 = vmatprep.subr.bf16.mxu0 0
    %610 = vmatpush1.bf16.msra.mxu0 %v582
    %611 = vmatprep.subr.bf16.mxu0 0
    %612 = vmatpush1.bf16.msra.mxu0 %v581
    %613 = vmatprep.subr.bf16.mxu0 0
    %614 = vmatpush2.bf16.msra.mxu0 0
    %615 = vmatprep.subr.bf16.mxu0 0
    %616 = vmatpush2.bf16.msra.mxu0 0
    %617 = vmatprep.subr.bf16.mxu0 0
    %618 = vmatpush2.bf16.msra.mxu0 0
    %619 = vmatprep.subr.bf16.mxu0 0
    %620 = vmatpush2.bf16.msra.mxu0 0
    %621 = vmatprep.subr.bf16.mxu0 0
    %622 = vmatpush2.bf16.msra.mxu0 0
    %623 = vmatprep.subr.bf16.mxu0 0
    %624 = vmatpush2.bf16.msra.mxu0 0
    %625 = vmatprep.subr.bf16.mxu0 0
    %626 = vmatpush2.bf16.msra.mxu0 0
    %627 = vmatprep.subr.bf16.mxu0 0
    %628 = vmatpush2.bf16.msra.mxu0 0
    %629 = vmatprep.mubr.bf16.mxu0 0
    %630 = vmatmul.mubr.bf16.gmra.mxu0 %v531
    %v631 = vpop.f32.mrf.mxu0
    %v632 = vadd.f32 0.0, %v631
    %v633 = vpop.f32.mrf.mxu0
    %v634 = vpop.f32.mrf.mxu0
    %v635 = vpop.f32.mrf.mxu0
    %636 = vdwg.mxu0
    %v637 = vadd.f32 %v307, %v632
    %v638 = vmax.f32 %v637, 0.0
    %s639 = scalar_lea.vmem %s4, 16
    %640 = vst [vmem:[%s639] sm:$0xff] %v638
    // Predicated region
    $region34: #{_forward_impl.1} parent=1 // pred_check
      _
    $region35: #{_forward_impl.1} parent=1 // pred_check_branch
      %642 = sbr.rel (0) target = $region37
    $region36: #{_forward_impl.1} parent=1 // pred_region
      _
    $region37: #{_forward_impl.1} parent=1 // pred_fallthru
      _
    // Predicated region
    $region38: #{_forward_impl.1} parent=1 // pred_check
      _
    $region39: #{_forward_impl.1} parent=1 // pred_check_branch
      %644 = sbr.rel (0) target = $region41
    $region40: #{_forward_impl.1} parent=1 // pred_region
      _
    $region41: #{_forward_impl.1} parent=1 // pred_fallthru
      _
    %645 = vsyncpa [#allocation3], 1
    %646 = vsyncpa [#allocation5], 1
    %647 = vsyncpa [#allocation8], 1

</llo_original>
